<compile_context>
chip_gen: v7x
topology: tpu7x:2x2x1
jax: 0.10.0
libtpu: 0.0.40
codegen_flags: <defaults>
</compile_context>

<pallas_src>
import math
from functools import partial

import jax
import jax.numpy as jnp
import numpy as np
from jax.experimental import pallas as pl
from jax.experimental.pallas import tpu as pltpu

LANE = 128  # TPU lane width


def _round_up(x, m):
    return ((x + m - 1) // m) * m


def _softplus(x):
    # Stable log(1 + exp(x)); matches torch.nn.Softplus() within f32 precision.
    return jnp.maximum(x, 0.0) + jnp.log1p(jnp.exp(-jnp.abs(x)))


def _leaky_relu(x, slope=0.01):
    return jnp.where(x >= 0.0, x, slope * x)


# ---------------------------------------------------------------------------
# Pallas kernel: one grid step == one group of lane-packed ensemble members.
# ---------------------------------------------------------------------------
def _ensemble_kernel(num_hidden, hidden_widths, out_w, n_rows, x_ref, *refs):
    # refs layout:
    #   W_0 .. W_{num_hidden-1}   packed (block-diagonal) hidden weights
    #   head_w                    packed [mean|logvar] head weights
    #   smalls                    [num_hidden+4, SW]: per-layer biases,
    #                             head bias, max_logvar, min_logvar, lv-mask
    #   out_ref                   [n, out_w]
    w_refs = refs[:num_hidden]
    head_w_ref = refs[num_hidden]
    smalls_ref = refs[num_hidden + 1]
    out_ref = refs[num_hidden + 2]

    inv_n = 1.0 / float(n_rows)
    eps = 1e-5

    h = x_ref[...].astype(jnp.float32)
    for i in range(num_hidden):
        w = hidden_widths[i]
        b = smalls_ref[i:i + 1, :w]                                   # (1, w)
        z = jnp.dot(h, w_refs[i][...], preferred_element_type=jnp.float32) + b
        # BatchNorm1d (training mode): biased batch var, gamma=1, beta=0.
        # Member columns are disjoint, so per-column stats are per-member.
        mu = jnp.sum(z, axis=0, keepdims=True) * inv_n
        zc = z - mu
        var = jnp.sum(zc * zc, axis=0, keepdims=True) * inv_n
        h = _leaky_relu(zc * jax.lax.rsqrt(var + eps))

    # Fused mean/logvar head for all members in this group.
    head = (jnp.dot(h, head_w_ref[...], preferred_element_type=jnp.float32)
            + smalls_ref[num_hidden:num_hidden + 1, :out_w])

    max_lv = smalls_ref[num_hidden + 1:num_hidden + 2, :out_w]
    min_lv = smalls_ref[num_hidden + 2:num_hidden + 3, :out_w]
    is_lv = smalls_ref[num_hidden + 3:num_hidden + 4, :out_w]          # 1.0 at logvar cols

    lv = max_lv - _softplus(max_lv - head)
    lv = min_lv + _softplus(lv - min_lv)

    # Single lane-dense full-width store: logvar columns -> exp(lv),
    # mean columns -> raw head output, padding columns -> 0.
    out_ref[...] = jnp.where(is_lv > 0.5, jnp.exp(lv), head)


# ---------------------------------------------------------------------------
# Host-side packing of E single-member parameter dicts.
# ---------------------------------------------------------------------------
def pack_ensemble(members, num_groups=1):
    """Pack E members into `num_groups` block-diagonal weight sets.

    num_groups=1 -> one grid step (best on v5e/v6e, 1 TensorCore).
    num_groups=2 -> two 'parallel' grid steps (uses both TensorCores on v7x).
    """
    E = len(members)
    assert E % num_groups == 0, "E must be divisible by num_groups"
    G = num_groups
    Eg = E // G
    S = members[0]["state_dim"]
    num_hidden = len(members[0]["layers"])
    total_dim = members[0]["layers"][0][0].shape[0]
    hidden_dims = [members[0]["layers"][i][0].shape[1] for i in range(num_hidden)]

    widths = [Eg * h for h in hidden_dims]            # packed hidden widths
    out_w = _round_up(Eg * 2 * S, LANE)               # packed head width (>=128)
    small_w = _round_up(max(widths + [out_w]), LANE)  # common width for coalesced smalls
    R = num_hidden + 4                                # bias rows + head_b + max + min + mask

    Ws = [np.zeros((G, total_dim, widths[0]), np.float32)]
    for i in range(1, num_hidden):
        Ws.append(np.zeros((G, widths[i - 1], widths[i]), np.float32))
    head_w = np.zeros((G, widths[-1], out_w), np.float32)
    smalls = np.zeros((G, R, small_w), np.float32)

    for m_idx, m in enumerate(members):
        g, e = divmod(m_idx, Eg)
        # hidden layers (block-diagonal placement)
        Ws[0][g, :, e * hidden_dims[0]:(e + 1) * hidden_dims[0]] = np.asarray(m["layers"][0][0])
        smalls[g, 0, e * hidden_dims[0]:(e + 1) * hidden_dims[0]] = np.asarray(m["layers"][0][1]).reshape(-1)
        for i in range(1, num_hidden):
            Ws[i][g,
                  e * hidden_dims[i - 1]:(e + 1) * hidden_dims[i - 1],
                  e * hidden_dims[i]:(e + 1) * hidden_dims[i]] = np.asarray(m["layers"][i][0])
            smalls[g, i, e * hidden_dims[i]:(e + 1) * hidden_dims[i]] = np.asarray(m["layers"][i][1]).reshape(-1)
        # fused head: member e owns columns [e*2S, e*2S+S) = mean, [e*2S+S, e*2S+2S) = logvar
        c0 = e * 2 * S
        rows = slice(e * hidden_dims[-1], (e + 1) * hidden_dims[-1])
        head_w[g, rows, c0:c0 + S] = np.asarray(m["mean_w"])
        head_w[g, rows, c0 + S:c0 + 2 * S] = np.asarray(m["logvar_w"])
        smalls[g, num_hidden, c0:c0 + S] = np.asarray(m["mean_b"]).reshape(-1)
        smalls[g, num_hidden, c0 + S:c0 + 2 * S] = np.asarray(m["logvar_b"]).reshape(-1)
        smalls[g, num_hidden + 1, c0 + S:c0 + 2 * S] = np.asarray(m["max_logvar"]).reshape(-1)
        smalls[g, num_hidden + 2, c0 + S:c0 + 2 * S] = np.asarray(m["min_logvar"]).reshape(-1)
        smalls[g, num_hidden + 3, c0 + S:c0 + 2 * S] = 1.0

    return dict(
        Ws=[jnp.asarray(w) for w in Ws],
        head_w=jnp.asarray(head_w),
        smalls=jnp.asarray(smalls),
        num_groups=G, members_per_group=Eg, state_dim=S,
        num_hidden=num_hidden, hidden_widths=tuple(widths),
        out_w=out_w, total_dim=total_dim)


# ---------------------------------------------------------------------------
# Wrappers
# ---------------------------------------------------------------------------
def ensemble_forward(x, packed):
    """Run all E ensemble members in one pallas_call (grid = num_groups).

    x: [n, total_dim]; packed: dict from pack_ensemble().
    Returns (means, variances), each [E, n, state_dim].
    """
    G = packed["num_groups"]
    Eg = packed["members_per_group"]
    S = packed["state_dim"]
    num_hidden = packed["num_hidden"]
    widths = packed["hidden_widths"]
    out_w = packed["out_w"]
    n, total_dim = x.shape
    assert total_dim == packed["total_dim"]

    args = [x]
    # x is shared by every group -> constant block index, stays VMEM-resident.
    in_specs = [pl.BlockSpec((n, total_dim), lambda g: (0, 0))]
    for w in packed["Ws"]:
        args.append(w)
        in_specs.append(pl.BlockSpec((None,) + w.shape[1:], lambda g: (g, 0, 0)))
    args.append(packed["head_w"])
    in_specs.append(pl.BlockSpec((None,) + packed["head_w"].shape[1:], lambda g: (g, 0, 0)))
    args.append(packed["smalls"])
    in_specs.append(pl.BlockSpec((None,) + packed["smalls"].shape[1:], lambda g: (g, 0, 0)))

    out = pl.pallas_call(
        partial(_ensemble_kernel, num_hidden, widths, out_w, n),
        out_shape=jax.ShapeDtypeStruct((G, n, out_w), jnp.float32),
        grid=(G,),
        in_specs=in_specs,
        out_specs=pl.BlockSpec((None, n, out_w), lambda g: (g, 0, 0)),
        compiler_params=pltpu.CompilerParams(
            dimension_semantics=("parallel",)),
    )(*args)

    # Un-pack: out[:, :, e*2S : e*2S+S] = means of member e, next S = variances.
    real = out[:, :, :Eg * 2 * S].reshape(G, n, Eg, 2 * S)
    real = jnp.transpose(real, (0, 2, 1, 3)).reshape(G * Eg, n, 2 * S)
    return real[..., :S], real[..., S:]


def ensemble_member_forward(x, params):
    """Single EnsembleMember forward (module-parity API): E = 1."""
    packed = pack_ensemble([params], num_groups=1)
    means, variances = ensemble_forward(x, packed)
    return means[0], variances[0]


# ---------------------------------------------------------------------------
# Deterministic parameter construction (mirrors EnsembleMember.__init__)
# ---------------------------------------------------------------------------
def _xavier_uniform(key, in_dim, out_dim, gain):
    # PyTorch xavier_uniform_ on weight of shape [out, in]; we store [in, out].
    bound = gain * math.sqrt(6.0 / (in_dim + out_dim))
    return jax.random.uniform(key, (in_dim, out_dim), jnp.float32, -bound, bound)


def build_params(key, state_dim, mu_dim, action_dim, hidden_dims,
                 exclude_mu=False, min_var=0.001, max_var=10.0):
    total_dim = state_dim + action_dim if exclude_mu else state_dim + mu_dim + action_dim
    dims = [total_dim] + list(hidden_dims)
    gain = math.sqrt(2.0)

    keys = jax.random.split(key, len(hidden_dims) + 2)
    layers = []
    for i in range(len(dims) - 1):
        w = _xavier_uniform(keys[i], dims[i], dims[i + 1], gain)
        b = jnp.zeros((1, dims[i + 1]), jnp.float32)
        layers.append((w, b))

    mean_w = _xavier_uniform(keys[-2], hidden_dims[-1], state_dim, gain)
    mean_b = jnp.zeros((1, state_dim), jnp.float32)
    logvar_w = _xavier_uniform(keys[-1], hidden_dims[-1], state_dim, gain)
    logvar_b = jnp.zeros((1, state_dim), jnp.float32)

    max_logvar = jnp.full((1, state_dim), math.log(max_var - min_var), jnp.float32)
    min_logvar = jnp.full((1, state_dim), math.log(min_var), jnp.float32)

    return dict(layers=layers, mean_w=mean_w, mean_b=mean_b,
                logvar_w=logvar_w, logvar_b=logvar_b,
                max_logvar=max_logvar, min_logvar=min_logvar,
                state_dim=state_dim), total_dim


# ---------------------------------------------------------------------------
# Pure-JAX reference for validation (single member)
# ---------------------------------------------------------------------------
def reference_forward(x, params):
    h = x
    for (w, b) in params["layers"]:
        z = h @ w + b
        mu = jnp.mean(z, axis=0, keepdims=True)
        var = jnp.mean((z - mu) ** 2, axis=0, keepdims=True)
        zhat = (z - mu) / jnp.sqrt(var + 1e-5)
        h = jnp.where(zhat >= 0, zhat, 0.01 * zhat)
    means = h @ params["mean_w"] + params["mean_b"]
    lv = h @ params["logvar_w"] + params["logvar_b"]
    lv = params["max_logvar"] - jax.nn.softplus(params["max_logvar"] - lv)
    lv = params["min_logvar"] + jax.nn.softplus(lv - params["min_logvar"])
    return means, jnp.exp(lv)


if __name__ == "__main__":
    key = jax.random.PRNGKey(0)

    # Small shapes consistent with the module.
    state_dim, mu_dim, action_dim = 4, 4, 2
    hidden_dims = [32, 32]
    n = 8
    E = 4  # ensemble members lane-packed into one pallas_call

    keys = jax.random.split(key, E + 1)
    members, total_dim = [], None
    for e in range(E):
        p, total_dim = build_params(keys[e], state_dim, mu_dim, action_dim, hidden_dims)
        members.append(p)
    x = jax.random.normal(keys[-1], (n, total_dim), jnp.float32)

    # One grid step, all members packed into full-width block-diagonal matmuls.
    packed1 = pack_ensemble(members, num_groups=1)
    means, variances = ensemble_forward(x, packed1)
    jax.block_until_ready((means, variances))
    for e in range(E):
        ref_m, ref_v = reference_forward(x, members[e])
        assert jnp.allclose(means[e], ref_m, atol=1e-4, rtol=1e-4)
        assert jnp.allclose(variances[e], ref_v, atol=1e-4, rtol=1e-4)

    # Two 'parallel' grid steps (half the members each) — v7x dual-TC path.
    packed2 = pack_ensemble(members, num_groups=2)
    means2, variances2 = ensemble_forward(x, packed2)
    jax.block_until_ready((means2, variances2))
    for e in range(E):
        ref_m, ref_v = reference_forward(x, members[e])
        assert jnp.allclose(means2[e], ref_m, atol=1e-4, rtol=1e-4)
        assert jnp.allclose(variances2[e], ref_v, atol=1e-4, rtol=1e-4)

    # Single-member (module-parity) path.
    m1, v1 = ensemble_member_forward(x, members[0])
    jax.block_until_ready((m1, v1))
    ref_m, ref_v = reference_forward(x, members[0])
    assert jnp.allclose(m1, ref_m, atol=1e-4, rtol=1e-4)
    assert jnp.allclose(v1, ref_v, atol=1e-4, rtol=1e-4)

    print("KERNEL_OK")
</pallas_src>

<mosaic_0001>
module attributes {stable_mosaic.version = 11 : i64} {
  func.func @_ensemble_kernel(%arg0: i32, %arg1: memref<8x10xf32, #tpu.memory_space<vmem>>, %arg2: memref<1x10x128xf32, #tpu.memory_space<vmem>>, %arg3: memref<1x128x128xf32, #tpu.memory_space<vmem>>, %arg4: memref<1x128x128xf32, #tpu.memory_space<vmem>>, %arg5: memref<1x6x128xf32, #tpu.memory_space<vmem>>, %arg6: memref<1x8x128xf32, #tpu.memory_space<vmem>>) attributes {dimension_semantics = [#tpu.dimension_semantics<parallel>], iteration_bounds = array<i64: 1>, scalar_prefetch = 0 : i64, scratch_operands = 0 : i64, tpu.core_type = #tpu.core_type<tc>, window_params = [{pipeline_mode = #tpu.pipeline_mode<synchronous>, transform_indices = @transform_0, window_bounds = array<i64: 8, 10>}, {transform_indices = @transform_1, window_bounds = array<i64: 1, 10, 128>}, {transform_indices = @transform_2, window_bounds = array<i64: 1, 128, 128>}, {transform_indices = @transform_3, window_bounds = array<i64: 1, 128, 128>}, {transform_indices = @transform_4, window_bounds = array<i64: 1, 6, 128>}, {transform_indices = @transform_5, window_bounds = array<i64: 1, 8, 128>}]} {
    %c0 = arith.constant 0 : index
    %c0_0 = arith.constant 0 : index
    %0 = vector.load %arg1[%c0, %c0_0] : memref<8x10xf32, #tpu.memory_space<vmem>>, vector<8x10xf32>
    %c0_1 = arith.constant 0 : index
    %c0_2 = arith.constant 0 : index
    %c0_3 = arith.constant 0 : index
    %1 = vector.load %arg5[%c0_1, %c0_2, %c0_3] : memref<1x6x128xf32, #tpu.memory_space<vmem>>, vector<1x1x128xf32>
    %2 = vector.shape_cast %1 : vector<1x1x128xf32> to vector<1x128xf32>
    %c0_4 = arith.constant 0 : index
    %c0_5 = arith.constant 0 : index
    %c0_6 = arith.constant 0 : index
    %3 = vector.load %arg2[%c0_4, %c0_5, %c0_6] : memref<1x10x128xf32, #tpu.memory_space<vmem>>, vector<1x10x128xf32>
    %4 = vector.shape_cast %3 : vector<1x10x128xf32> to vector<10x128xf32>
    %cst = arith.constant dense<0.000000e+00> : vector<8x128xf32>
    %5 = tpu.matmul %0, %4, %cst {dimension_numbers = #tpu.dot_dimension_numbers<[1], [0], [0], [1], [0, 0, 1, 1], [], []>} : vector<8x10xf32>, vector<10x128xf32>, vector<8x128xf32> -> vector<8x128xf32>
    %6 = vector.broadcast %2 : vector<1x128xf32> to vector<8x128xf32>
    %7 = arith.addf %5, %6 : vector<8x128xf32>
    %cst_7 = arith.constant dense<0.000000e+00> : vector<128xf32>
    %8 = vector.multi_reduction <add>, %7, %cst_7 [0] : vector<8x128xf32> to vector<128xf32>
    %9 = vector.shape_cast %8 : vector<128xf32> to vector<1x128xf32>
    %cst_8 = arith.constant 1.250000e-01 : f32
    %10 = vector.broadcast %cst_8 : f32 to vector<1x128xf32>
    %11 = arith.mulf %9, %10 : vector<1x128xf32>
    %12 = vector.broadcast %11 : vector<1x128xf32> to vector<8x128xf32>
    %13 = arith.subf %7, %12 : vector<8x128xf32>
    %14 = arith.mulf %13, %13 : vector<8x128xf32>
    %cst_9 = arith.constant dense<0.000000e+00> : vector<128xf32>
    %15 = vector.multi_reduction <add>, %14, %cst_9 [0] : vector<8x128xf32> to vector<128xf32>
    %16 = vector.shape_cast %15 : vector<128xf32> to vector<1x128xf32>
    %cst_10 = arith.constant 1.250000e-01 : f32
    %17 = vector.broadcast %cst_10 : f32 to vector<1x128xf32>
    %18 = arith.mulf %16, %17 : vector<1x128xf32>
    %cst_11 = arith.constant 9.99999974E-6 : f32
    %19 = vector.broadcast %cst_11 : f32 to vector<1x128xf32>
    %20 = arith.addf %18, %19 : vector<1x128xf32>
    %21 = math.rsqrt %20 : vector<1x128xf32>
    %22 = vector.broadcast %21 : vector<1x128xf32> to vector<8x128xf32>
    %23 = arith.mulf %13, %22 : vector<8x128xf32>
    %cst_12 = arith.constant 0.000000e+00 : f32
    %24 = vector.broadcast %cst_12 : f32 to vector<8x128xf32>
    %25 = arith.cmpf oge, %23, %24 : vector<8x128xf32>
    %cst_13 = arith.constant 0.00999999977 : f32
    %26 = vector.broadcast %cst_13 : f32 to vector<8x128xf32>
    %27 = arith.mulf %26, %23 : vector<8x128xf32>
    %28 = arith.select %25, %23, %27 : vector<8x128xi1>, vector<8x128xf32>
    %c0_14 = arith.constant 0 : index
    %c1 = arith.constant 1 : index
    %c0_15 = arith.constant 0 : index
    %29 = vector.load %arg5[%c0_14, %c1, %c0_15] : memref<1x6x128xf32, #tpu.memory_space<vmem>>, vector<1x1x128xf32>
    %30 = vector.shape_cast %29 : vector<1x1x128xf32> to vector<1x128xf32>
    %c0_16 = arith.constant 0 : index
    %c0_17 = arith.constant 0 : index
    %c0_18 = arith.constant 0 : index
    %31 = vector.load %arg3[%c0_16, %c0_17, %c0_18] : memref<1x128x128xf32, #tpu.memory_space<vmem>>, vector<1x128x128xf32>
    %32 = vector.shape_cast %31 : vector<1x128x128xf32> to vector<128x128xf32>
    %cst_19 = arith.constant dense<0.000000e+00> : vector<8x128xf32>
    %33 = tpu.matmul %28, %32, %cst_19 {dimension_numbers = #tpu.dot_dimension_numbers<[1], [0], [0], [1], [0, 0, 1, 1], [], []>} : vector<8x128xf32>, vector<128x128xf32>, vector<8x128xf32> -> vector<8x128xf32>
    %34 = vector.broadcast %30 : vector<1x128xf32> to vector<8x128xf32>
    %35 = arith.addf %33, %34 : vector<8x128xf32>
    %cst_20 = arith.constant dense<0.000000e+00> : vector<128xf32>
    %36 = vector.multi_reduction <add>, %35, %cst_20 [0] : vector<8x128xf32> to vector<128xf32>
    %37 = vector.shape_cast %36 : vector<128xf32> to vector<1x128xf32>
    %cst_21 = arith.constant 1.250000e-01 : f32
    %38 = vector.broadcast %cst_21 : f32 to vector<1x128xf32>
    %39 = arith.mulf %37, %38 : vector<1x128xf32>
    %40 = vector.broadcast %39 : vector<1x128xf32> to vector<8x128xf32>
    %41 = arith.subf %35, %40 : vector<8x128xf32>
    %42 = arith.mulf %41, %41 : vector<8x128xf32>
    %cst_22 = arith.constant dense<0.000000e+00> : vector<128xf32>
    %43 = vector.multi_reduction <add>, %42, %cst_22 [0] : vector<8x128xf32> to vector<128xf32>
    %44 = vector.shape_cast %43 : vector<128xf32> to vector<1x128xf32>
    %cst_23 = arith.constant 1.250000e-01 : f32
    %45 = vector.broadcast %cst_23 : f32 to vector<1x128xf32>
    %46 = arith.mulf %44, %45 : vector<1x128xf32>
    %cst_24 = arith.constant 9.99999974E-6 : f32
    %47 = vector.broadcast %cst_24 : f32 to vector<1x128xf32>
    %48 = arith.addf %46, %47 : vector<1x128xf32>
    %49 = math.rsqrt %48 : vector<1x128xf32>
    %50 = vector.broadcast %49 : vector<1x128xf32> to vector<8x128xf32>
    %51 = arith.mulf %41, %50 : vector<8x128xf32>
    %cst_25 = arith.constant 0.000000e+00 : f32
    %52 = vector.broadcast %cst_25 : f32 to vector<8x128xf32>
    %53 = arith.cmpf oge, %51, %52 : vector<8x128xf32>
    %cst_26 = arith.constant 0.00999999977 : f32
    %54 = vector.broadcast %cst_26 : f32 to vector<8x128xf32>
    %55 = arith.mulf %54, %51 : vector<8x128xf32>
    %56 = arith.select %53, %51, %55 : vector<8x128xi1>, vector<8x128xf32>
    %c0_27 = arith.constant 0 : index
    %c0_28 = arith.constant 0 : index
    %c0_29 = arith.constant 0 : index
    %57 = vector.load %arg4[%c0_27, %c0_28, %c0_29] : memref<1x128x128xf32, #tpu.memory_space<vmem>>, vector<1x128x128xf32>
    %58 = vector.shape_cast %57 : vector<1x128x128xf32> to vector<128x128xf32>
    %cst_30 = arith.constant dense<0.000000e+00> : vector<8x128xf32>
    %59 = tpu.matmul %56, %58, %cst_30 {dimension_numbers = #tpu.dot_dimension_numbers<[1], [0], [0], [1], [0, 0, 1, 1], [], []>} : vector<8x128xf32>, vector<128x128xf32>, vector<8x128xf32> -> vector<8x128xf32>
    %c0_31 = arith.constant 0 : index
    %c2 = arith.constant 2 : index
    %c0_32 = arith.constant 0 : index
    %60 = vector.load %arg5[%c0_31, %c2, %c0_32] : memref<1x6x128xf32, #tpu.memory_space<vmem>>, vector<1x1x128xf32>
    %61 = vector.shape_cast %60 : vector<1x1x128xf32> to vector<1x128xf32>
    %62 = vector.broadcast %61 : vector<1x128xf32> to vector<8x128xf32>
    %63 = arith.addf %59, %62 : vector<8x128xf32>
    %c0_33 = arith.constant 0 : index
    %c3 = arith.constant 3 : index
    %c0_34 = arith.constant 0 : index
    %64 = vector.load %arg5[%c0_33, %c3, %c0_34] : memref<1x6x128xf32, #tpu.memory_space<vmem>>, vector<1x1x128xf32>
    %65 = vector.shape_cast %64 : vector<1x1x128xf32> to vector<1x128xf32>
    %c0_35 = arith.constant 0 : index
    %c4 = arith.constant 4 : index
    %c0_36 = arith.constant 0 : index
    %66 = vector.load %arg5[%c0_35, %c4, %c0_36] : memref<1x6x128xf32, #tpu.memory_space<vmem>>, vector<1x1x128xf32>
    %67 = vector.shape_cast %66 : vector<1x1x128xf32> to vector<1x128xf32>
    %c0_37 = arith.constant 0 : index
    %c5 = arith.constant 5 : index
    %c0_38 = arith.constant 0 : index
    %68 = vector.load %arg5[%c0_37, %c5, %c0_38] : memref<1x6x128xf32, #tpu.memory_space<vmem>>, vector<1x1x128xf32>
    %69 = vector.shape_cast %68 : vector<1x1x128xf32> to vector<1x128xf32>
    %70 = vector.broadcast %65 : vector<1x128xf32> to vector<8x128xf32>
    %71 = arith.subf %70, %63 : vector<8x128xf32>
    %cst_39 = arith.constant 0.000000e+00 : f32
    %72 = vector.broadcast %cst_39 : f32 to vector<8x128xf32>
    %73 = arith.maximumf %71, %72 : vector<8x128xf32>
    %74 = math.absf %71 : vector<8x128xf32>
    %cst_40 = arith.constant 0.000000e+00 : f32
    %75 = vector.broadcast %cst_40 : f32 to vector<8x128xf32>
    %76 = arith.subf %75, %74 : vector<8x128xf32>
    %77 = math.exp %76 : vector<8x128xf32>
    %78 = math.log1p %77 : vector<8x128xf32>
    %79 = arith.addf %73, %78 : vector<8x128xf32>
    %80 = vector.broadcast %65 : vector<1x128xf32> to vector<8x128xf32>
    %81 = arith.subf %80, %79 : vector<8x128xf32>
    %82 = vector.broadcast %67 : vector<1x128xf32> to vector<8x128xf32>
    %83 = arith.subf %81, %82 : vector<8x128xf32>
    %cst_41 = arith.constant 0.000000e+00 : f32
    %84 = vector.broadcast %cst_41 : f32 to vector<8x128xf32>
    %85 = arith.maximumf %83, %84 : vector<8x128xf32>
    %86 = math.absf %83 : vector<8x128xf32>
    %cst_42 = arith.constant 0.000000e+00 : f32
    %87 = vector.broadcast %cst_42 : f32 to vector<8x128xf32>
    %88 = arith.subf %87, %86 : vector<8x128xf32>
    %89 = math.exp %88 : vector<8x128xf32>
    %90 = math.log1p %89 : vector<8x128xf32>
    %91 = arith.addf %85, %90 : vector<8x128xf32>
    %92 = vector.broadcast %67 : vector<1x128xf32> to vector<8x128xf32>
    %93 = arith.addf %92, %91 : vector<8x128xf32>
    %cst_43 = arith.constant 5.000000e-01 : f32
    %94 = vector.broadcast %cst_43 : f32 to vector<1x128xf32>
    %95 = arith.cmpf ogt, %69, %94 : vector<1x128xf32>
    %96 = math.exp %93 : vector<8x128xf32>
    %97 = vector.shape_cast %95 : vector<1x128xi1> to vector<1x128xi1>
    %98 = vector.broadcast %97 : vector<1x128xi1> to vector<8x128xi1>
    %99 = arith.select %98, %96, %63 : vector<8x128xi1>, vector<8x128xf32>
    %c0_44 = arith.constant 0 : index
    %c0_45 = arith.constant 0 : index
    %c0_46 = arith.constant 0 : index
    %100 = vector.load %arg6[%c0_44, %c0_45, %c0_46] : memref<1x8x128xf32, #tpu.memory_space<vmem>>, vector<1x8x128xf32>
    %101 = vector.shape_cast %100 : vector<1x8x128xf32> to vector<8x128xf32>
    %102 = vector.shape_cast %99 : vector<8x128xf32> to vector<1x8x128xf32>
    tpu.vector_store %arg6[%c0_44, %c0_45, %c0_46], %102 {strides = array<i32>} : memref<1x8x128xf32, #tpu.memory_space<vmem>>, vector<1x8x128xf32>,
    return
  }
  func.func @transform_0(%arg0: i32) -> (i32, i32) {
    %c0_i32 = arith.constant 0 : i32
    %c0_i32_0 = arith.constant 0 : i32
    %c0_i32_1 = arith.constant 0 : i32
    return %c0_i32, %c0_i32_0 : i32, i32
  }
  func.func @transform_1(%arg0: i32) -> (i32, i32, i32) {
    %c0_i32 = arith.constant 0 : i32
    %c0_i32_0 = arith.constant 0 : i32
    %c0_i32_1 = arith.constant 0 : i32
    return %arg0, %c0_i32, %c0_i32_0 : i32, i32, i32
  }
  func.func @transform_2(%arg0: i32) -> (i32, i32, i32) {
    %c0_i32 = arith.constant 0 : i32
    %c0_i32_0 = arith.constant 0 : i32
    %c0_i32_1 = arith.constant 0 : i32
    return %arg0, %c0_i32, %c0_i32_0 : i32, i32, i32
  }
  func.func @transform_3(%arg0: i32) -> (i32, i32, i32) {
    %c0_i32 = arith.constant 0 : i32
    %c0_i32_0 = arith.constant 0 : i32
    %c0_i32_1 = arith.constant 0 : i32
    return %arg0, %c0_i32, %c0_i32_0 : i32, i32, i32
  }
  func.func @transform_4(%arg0: i32) -> (i32, i32, i32) {
    %c0_i32 = arith.constant 0 : i32
    %c0_i32_0 = arith.constant 0 : i32
    %c0_i32_1 = arith.constant 0 : i32
    return %arg0, %c0_i32, %c0_i32_0 : i32, i32, i32
  }
  func.func @transform_5(%arg0: i32) -> (i32, i32, i32) {
    %c0_i32 = arith.constant 0 : i32
    %c0_i32_0 = arith.constant 0 : i32
    %c0_i32_1 = arith.constant 0 : i32
    return %arg0, %c0_i32, %c0_i32_0 : i32, i32, i32
  }
}

</mosaic_0001>

<llo_original>
// kernel: tpu_custom_call.1
$region0: #{tpu_custom_call.1}
  #allocation0 [shape = 'u32[]', space=smem, size = 0x4, offset = 0x4, fixed_abs, tag = 'smem constant byte address 0x4 - core index']
  #allocation1 [shape = 'u32[144,128]{1,0:T(1,128)}', space=vmem, size = 0x12000, scoped, tag = 'internal scratch']
  %s0 = inlined_call_operand.vmem [shape: f32[8,10], index: 0, kind: input, shape index: {}]
  %s1 = inlined_call_operand.vmem [shape: f32[1,10,128], index: 1, kind: input, shape index: {}]
  %s2 = inlined_call_operand.hbm [shape: f32[1,128,128], index: 2, kind: input, shape index: {}]
  %s3 = inlined_call_operand.hbm [shape: f32[1,128,128], index: 3, kind: input, shape index: {}]
  %s4 = inlined_call_operand.vmem [shape: f32[1,6,128], index: 4, kind: input, shape index: {}]
  %s5 = inlined_call_operand.hbm [shape: f32[1,8,128], index: 5, kind: output, shape index: {}]
  %s6 = sld [smem:[#allocation0]]
  $region38: #{tpu_custom_call.1} parent=0
    _
  %s8 = ssub.s32 1, %s6
  %s9 = scalar_select 0, %s8, %s6
  $region1: #{tpu_custom_call.1} parent=0
    #allocation2 [shape = 'u8[65536]{0}', space=vmem, size = 0x10000, scoped, tag = 'input window, operand 2, single buffered']
    #allocation3 [shape = 's32[1]{0}', space=sflag, size = 0x4, scoped, tag = 'scoped memory for tpu_custom_call.1']
    #allocation4 [shape = 's32[1]{0}', space=sflag, size = 0x4, scoped, tag = 'scoped memory for tpu_custom_call.1']
    #allocation5 [shape = 'u8[65536]{0}', space=vmem, size = 0x10000, scoped, tag = 'input window, operand 3, single buffered']
    #allocation6 [shape = 's32[1]{0}', space=sflag, size = 0x4, scoped, tag = 'scoped memory for tpu_custom_call.1']
    #allocation7 [shape = 'u8[4096]{0}', space=vmem, size = 0x1000, scoped, tag = 'output window, operand 0, single buffered']
    %10 = vsyncpa [#allocation3], 0
    %11 = vsyncpa [#allocation6], 0
    %12 = vsyncpa [#allocation4], 0
    // Predicated region
    $region2: #{tpu_custom_call.1} parent=1 // pred_check
      _
    $region3: #{tpu_custom_call.1} parent=1 // pred_check_branch
      %14 = sbr.rel (0) target = $region5
    $region4: #{tpu_custom_call.1} parent=1 // pred_region
      _
    $region5: #{tpu_custom_call.1} parent=1 // pred_fallthru
      _
    // Predicated region
    $region6: #{tpu_custom_call.1} parent=1 // pred_check
      _
    $region7: #{tpu_custom_call.1} parent=1 // pred_check_branch
      %16 = sbr.rel (0) target = $region9
    $region8: #{tpu_custom_call.1} parent=1 // pred_region
      _
    $region9: #{tpu_custom_call.1} parent=1 // pred_fallthru
      _
    // Predicated region
    $region10: #{tpu_custom_call.1} parent=1 // pred_check
      _
    $region11: #{tpu_custom_call.1} parent=1 // pred_check_branch
      %18 = sbr.rel (0) target = $region13
    $region12: #{tpu_custom_call.1} parent=1 // pred_region
      %s20 = ssub.s32 2048, 2048
      %21 = vsyncadd [#allocation3], %s20
      %s22 = sshll.u32 [#allocation2], 4
      %s23 = int_to_ptr.vmem [resolvable:$true] %s22
      %28 = dma.hbm_to_vmem [thread:$0]  %s2, 2048, %s23, [#allocation3], 128, 128, 8
    $region13: #{tpu_custom_call.1} parent=1 // pred_fallthru
      _
    // Predicated region
    $region14: #{tpu_custom_call.1} parent=1 // pred_check
      _
    $region15: #{tpu_custom_call.1} parent=1 // pred_check_branch
      %30 = sbr.rel (0) target = $region17
    $region16: #{tpu_custom_call.1} parent=1 // pred_region
      %s32 = ssub.s32 2048, 2048
      %33 = vsyncadd [#allocation6], %s32
      %s34 = sshll.u32 [#allocation5], 4
      %s35 = int_to_ptr.vmem [resolvable:$true] %s34
      %40 = dma.hbm_to_vmem [thread:$0]  %s3, 2048, %s35, [#allocation6], 128, 128, 8
    $region17: #{tpu_custom_call.1} parent=1 // pred_fallthru
      _
    // Predicated region
    $region18: #{tpu_custom_call.1} parent=1 // pred_check
      _
    $region19: #{tpu_custom_call.1} parent=1 // pred_check_branch
      %42 = sbr.rel (0) target = $region21
    $region20: #{tpu_custom_call.1} parent=1 // pred_region
      _
    $region21: #{tpu_custom_call.1} parent=1 // pred_fallthru
      _
    // Predicated region
    $region22: #{tpu_custom_call.1} parent=1 // pred_check
      _
    $region23: #{tpu_custom_call.1} parent=1 // pred_check_branch
      %44 = sbr.rel (0) target = $region25
    $region24: #{tpu_custom_call.1} parent=1 // pred_region
      %45 = dma.done [#allocation3], 2048
    $region25: #{tpu_custom_call.1} parent=1 // pred_fallthru
      _
    // Predicated region
    $region26: #{tpu_custom_call.1} parent=1 // pred_check
      _
    $region27: #{tpu_custom_call.1} parent=1 // pred_check_branch
      %47 = sbr.rel (0) target = $region29
    $region28: #{tpu_custom_call.1} parent=1 // pred_region
      %48 = dma.done [#allocation6], 2048
    $region29: #{tpu_custom_call.1} parent=1 // pred_fallthru
      _
    %v49 = vld [vmem:[%s0] sm:$0xff]
    %v50 = vld [vmem:[%s4] sm:$0x1]
    %v51 = vld [vmem:[%s1] sm:$0xff]
    %v52 = vld [vmem:[%s1 + $0x8] sm:$0x3]
    %v53 = vlaneseq
    %v54 = vshrl.u32 %v53, 7
    %v55 = vsub.s32 0, %v54
    %v56 = vrot.slane %v50, %v55
    %vm57 = vcmask 80896
    %v59 = vsel %vm57, %v49, 0
    %vm61 = vcmask 1041408
    %v63 = vsel %vm61, %v52, 0
    %65 = vmatprep.subr.mxu0 0.0
    %66 = vmatpush1.msra.mxu0 %v51
    %67 = vmatprep.subr.mxu0 0.0
    %68 = vmatpush1.msra.mxu0 %v63
    %69 = vmatprep.subr.mxu0 0.0
    %70 = vmatpush1.msra.mxu0 0.0
    %71 = vmatprep.subr.mxu0 0.0
    %72 = vmatpush1.msra.mxu0 0.0
    %73 = vmatprep.subr.mxu0 0.0
    %74 = vmatpush1.msra.mxu0 0.0
    %75 = vmatprep.subr.mxu0 0.0
    %76 = vmatpush1.msra.mxu0 0.0
    %77 = vmatprep.subr.mxu0 0.0
    %78 = vmatpush1.msra.mxu0 0.0
    %79 = vmatprep.subr.mxu0 0.0
    %80 = vmatpush1.msra.mxu0 0.0
    %81 = vmatprep.subr.mxu0 0.0
    %82 = vmatpush1.msra.mxu0 0.0
    %83 = vmatprep.subr.mxu0 0.0
    %84 = vmatpush1.msra.mxu0 0.0
    %85 = vmatprep.subr.mxu0 0.0
    %86 = vmatpush1.msra.mxu0 0.0
    %87 = vmatprep.subr.mxu0 0.0
    %88 = vmatpush1.msra.mxu0 0.0
    %89 = vmatprep.subr.mxu0 0.0
    %90 = vmatpush1.msra.mxu0 0.0
    %91 = vmatprep.subr.mxu0 0.0
    %92 = vmatpush1.msra.mxu0 0.0
    %93 = vmatprep.subr.mxu0 0.0
    %94 = vmatpush1.msra.mxu0 0.0
    %95 = vmatprep.subr.mxu0 0.0
    %96 = vmatpush1.msra.mxu0 0.0
    %97 = vmatprep.subr.mxu0 0.0
    %98 = vmatpush1.msra.mxu0 0.0
    %99 = vmatprep.subr.mxu0 0.0
    %100 = vmatpush1.msra.mxu0 0.0
    %101 = vmatprep.subr.mxu0 0.0
    %102 = vmatpush1.msra.mxu0 0.0
    %103 = vmatprep.subr.mxu0 0.0
    %104 = vmatpush1.msra.mxu0 0.0
    %105 = vmatprep.subr.mxu0 0.0
    %106 = vmatpush1.msra.mxu0 0.0
    %107 = vmatprep.subr.mxu0 0.0
    %108 = vmatpush1.msra.mxu0 0.0
    %109 = vmatprep.subr.mxu0 0.0
    %110 = vmatpush1.msra.mxu0 0.0
    %111 = vmatprep.subr.mxu0 0.0
    %112 = vmatpush1.msra.mxu0 0.0
    %113 = vmatprep.subr.mxu0 0.0
    %114 = vmatpush1.msra.mxu0 0.0
    %115 = vmatprep.subr.mxu0 0.0
    %116 = vmatpush1.msra.mxu0 0.0
    %117 = vmatprep.subr.mxu0 0.0
    %118 = vmatpush1.msra.mxu0 0.0
    %119 = vmatprep.subr.mxu0 0.0
    %120 = vmatpush1.msra.mxu0 0.0
    %121 = vmatprep.subr.mxu0 0.0
    %122 = vmatpush1.msra.mxu0 0.0
    %123 = vmatprep.subr.mxu0 0.0
    %124 = vmatpush1.msra.mxu0 0.0
    %125 = vmatprep.subr.mxu0 0.0
    %126 = vmatpush1.msra.mxu0 0.0
    %127 = vmatprep.subr.mxu0 0.0
    %128 = vmatpush1.msra.mxu0 0.0
    %129 = vmatprep.mubr.f32.mxu0 0.0
    %130 = vmatmul.mubr.f32.gmra.mrb[0].mxu0 %v59
    %v131 = vpop.f32.mrb[0].mxu0
    %v132 = vadd.f32 %v56, %v131
    %v133 = vpop.f32.mrb[0].mxu0
    %134 = vdwg.mxu0
    %v135 = vrot.slane %v132, 4
    %v136 = vadd.f32 %v132, %v135
    %v137 = vrot.slane %v136, 2
    %v138 = vadd.f32 %v136, %v137
    %v139 = vrot.slane %v138, 1
    %v140 = vadd.f32 %v138, %v139
    %v141 = vmul.f32 %v140, 0.125
    %v142 = vsub.f32 %v132, %v141
    %v143 = vmul.f32 %v142, %v142
    %v144 = vrot.slane %v143, 4
    %v145 = vadd.f32 %v143, %v144
    %v146 = vrot.slane %v145, 2
    %v147 = vadd.f32 %v145, %v146
    %v148 = vrot.slane %v147, 1
    %v149 = vadd.f32 %v147, %v148
    %v150 = vmul.f32 %v149, 0.125
    %v151 = vadd.f32 %v150, 1e-05
    %v152 = vrsqrt.pop %v151
    %v153 = vmul.f32 %v142, %v152
    %vm154 = vcmp.ge.f32.partialorder %v153, 0.0
    %v155 = vmul.f32 %v153, 0.01
    %v156 = vsel %vm154, %v153, %v155
    %v157 = vld [vmem:[%s4 + $0x1] sm:$0x1]
    %v158 = vld [vmem:[#allocation2] sm:$0xff]
    %v159 = vld [vmem:[#allocation2 + $0x8] sm:$0xff]
    %v160 = vld [vmem:[#allocation2 + $0x10] sm:$0xff]
    %v161 = vld [vmem:[#allocation2 + $0x18] sm:$0xff]
    %v162 = vld [vmem:[#allocation2 + $0x20] sm:$0xff]
    %v163 = vld [vmem:[#allocation2 + $0x28] sm:$0xff]
    %v164 = vld [vmem:[#allocation2 + $0x30] sm:$0xff]
    %v165 = vld [vmem:[#allocation2 + $0x38] sm:$0xff]
    %v166 = vld [vmem:[#allocation2 + $0x40] sm:$0xff]
    %v167 = vld [vmem:[#allocation2 + $0x48] sm:$0xff]
    %v168 = vld [vmem:[#allocation2 + $0x50] sm:$0xff]
    %v169 = vld [vmem:[#allocation2 + $0x58] sm:$0xff]
    %v170 = vld [vmem:[#allocation2 + $0x60] sm:$0xff]
    %v171 = vld [vmem:[#allocation2 + $0x68] sm:$0xff]
    %v172 = vld [vmem:[#allocation2 + $0x70] sm:$0xff]
    %v173 = vld [vmem:[#allocation2 + $0x78] sm:$0xff]
    %v174 = vlaneseq
    %v175 = vshrl.u32 %v174, 7
    %v176 = vsub.s32 0, %v175
    %v177 = vrot.slane %v157, %v176
    %178 = vmatprep.subr.mxu0 0.0
    %179 = vmatpush1.msra.mxu0 %v158
    %180 = vmatprep.subr.mxu0 0.0
    %181 = vmatpush1.msra.mxu0 %v159
    %182 = vmatprep.subr.mxu0 0.0
    %183 = vmatpush1.msra.mxu0 %v160
    %184 = vmatprep.subr.mxu0 0.0
    %185 = vmatpush1.msra.mxu0 %v161
    %186 = vmatprep.subr.mxu0 0.0
    %187 = vmatpush1.msra.mxu0 %v162
    %188 = vmatprep.subr.mxu0 0.0
    %189 = vmatpush1.msra.mxu0 %v163
    %190 = vmatprep.subr.mxu0 0.0
    %191 = vmatpush1.msra.mxu0 %v164
    %192 = vmatprep.subr.mxu0 0.0
    %193 = vmatpush1.msra.mxu0 %v165
    %194 = vmatprep.subr.mxu0 0.0
    %195 = vmatpush1.msra.mxu0 %v166
    %196 = vmatprep.subr.mxu0 0.0
    %197 = vmatpush1.msra.mxu0 %v167
    %198 = vmatprep.subr.mxu0 0.0
    %199 = vmatpush1.msra.mxu0 %v168
    %200 = vmatprep.subr.mxu0 0.0
    %201 = vmatpush1.msra.mxu0 %v169
    %202 = vmatprep.subr.mxu0 0.0
    %203 = vmatpush1.msra.mxu0 %v170
    %204 = vmatprep.subr.mxu0 0.0
    %205 = vmatpush1.msra.mxu0 %v171
    %206 = vmatprep.subr.mxu0 0.0
    %207 = vmatpush1.msra.mxu0 %v172
    %208 = vmatprep.subr.mxu0 0.0
    %209 = vmatpush1.msra.mxu0 %v173
    %210 = vmatprep.subr.mxu0 0.0
    %211 = vmatpush1.msra.mxu0 0.0
    %212 = vmatprep.subr.mxu0 0.0
    %213 = vmatpush1.msra.mxu0 0.0
    %214 = vmatprep.subr.mxu0 0.0
    %215 = vmatpush1.msra.mxu0 0.0
    %216 = vmatprep.subr.mxu0 0.0
    %217 = vmatpush1.msra.mxu0 0.0
    %218 = vmatprep.subr.mxu0 0.0
    %219 = vmatpush1.msra.mxu0 0.0
    %220 = vmatprep.subr.mxu0 0.0
    %221 = vmatpush1.msra.mxu0 0.0
    %222 = vmatprep.subr.mxu0 0.0
    %223 = vmatpush1.msra.mxu0 0.0
    %224 = vmatprep.subr.mxu0 0.0
    %225 = vmatpush1.msra.mxu0 0.0
    %226 = vmatprep.subr.mxu0 0.0
    %227 = vmatpush1.msra.mxu0 0.0
    %228 = vmatprep.subr.mxu0 0.0
    %229 = vmatpush1.msra.mxu0 0.0
    %230 = vmatprep.subr.mxu0 0.0
    %231 = vmatpush1.msra.mxu0 0.0
    %232 = vmatprep.subr.mxu0 0.0
    %233 = vmatpush1.msra.mxu0 0.0
    %234 = vmatprep.subr.mxu0 0.0
    %235 = vmatpush1.msra.mxu0 0.0
    %236 = vmatprep.subr.mxu0 0.0
    %237 = vmatpush1.msra.mxu0 0.0
    %238 = vmatprep.subr.mxu0 0.0
    %239 = vmatpush1.msra.mxu0 0.0
    %240 = vmatprep.subr.mxu0 0.0
    %241 = vmatpush1.msra.mxu0 0.0
    %242 = vmatprep.mubr.f32.mxu0 0.0
    %243 = vmatmul.mubr.f32.gmra.mrb[0].mxu0 %v156
    %v244 = vpop.f32.mrb[0].mxu0
    %v245 = vadd.f32 %v177, %v244
    %v246 = vpop.f32.mrb[0].mxu0
    %247 = vdwg.mxu0
    %v248 = vrot.slane %v245, 4
    %v249 = vadd.f32 %v245, %v248
    %v250 = vrot.slane %v249, 2
    %v251 = vadd.f32 %v249, %v250
    %v252 = vrot.slane %v251, 1
    %v253 = vadd.f32 %v251, %v252
    %v254 = vmul.f32 %v253, 0.125
    %v255 = vsub.f32 %v245, %v254
    %v256 = vmul.f32 %v255, %v255
    %v257 = vrot.slane %v256, 4
    %v258 = vadd.f32 %v256, %v257
    %v259 = vrot.slane %v258, 2
    %v260 = vadd.f32 %v258, %v259
    %v261 = vrot.slane %v260, 1
    %v262 = vadd.f32 %v260, %v261
    %v263 = vmul.f32 %v262, 0.125
    %v264 = vadd.f32 %v263, 1e-05
    %v265 = vrsqrt.pop %v264
    %v266 = vmul.f32 %v255, %v265
    %vm267 = vcmp.ge.f32.partialorder %v266, 0.0
    %v268 = vmul.f32 %v266, 0.01
    %v269 = vsel %vm267, %v266, %v268
    %v270 = vld [vmem:[#allocation5] sm:$0xff]
    %v271 = vld [vmem:[#allocation5 + $0x8] sm:$0xff]
    %v272 = vld [vmem:[#allocation5 + $0x10] sm:$0xff]
    %v273 = vld [vmem:[#allocation5 + $0x18] sm:$0xff]
    %v274 = vld [vmem:[#allocation5 + $0x20] sm:$0xff]
    %v275 = vld [vmem:[#allocation5 + $0x28] sm:$0xff]
    %v276 = vld [vmem:[#allocation5 + $0x30] sm:$0xff]
    %v277 = vld [vmem:[#allocation5 + $0x38] sm:$0xff]
    %v278 = vld [vmem:[#allocation5 + $0x40] sm:$0xff]
    %v279 = vld [vmem:[#allocation5 + $0x48] sm:$0xff]
    %v280 = vld [vmem:[#allocation5 + $0x50] sm:$0xff]
    %v281 = vld [vmem:[#allocation5 + $0x58] sm:$0xff]
    %v282 = vld [vmem:[#allocation5 + $0x60] sm:$0xff]
    %v283 = vld [vmem:[#allocation5 + $0x68] sm:$0xff]
    %v284 = vld [vmem:[#allocation5 + $0x70] sm:$0xff]
    %v285 = vld [vmem:[#allocation5 + $0x78] sm:$0xff]
    %v286 = vld [vmem:[%s4 + $0x2] sm:$0x1]
    %v287 = vlaneseq
    %v288 = vshrl.u32 %v287, 7
    %v289 = vsub.s32 0, %v288
    %v290 = vrot.slane %v286, %v289
    %291 = vmatprep.subr.mxu0 0.0
    %292 = vmatpush1.msra.mxu0 %v270
    %293 = vmatprep.subr.mxu0 0.0
    %294 = vmatpush1.msra.mxu0 %v271
    %295 = vmatprep.subr.mxu0 0.0
    %296 = vmatpush1.msra.mxu0 %v272
    %297 = vmatprep.subr.mxu0 0.0
    %298 = vmatpush1.msra.mxu0 %v273
    %299 = vmatprep.subr.mxu0 0.0
    %300 = vmatpush1.msra.mxu0 %v274
    %301 = vmatprep.subr.mxu0 0.0
    %302 = vmatpush1.msra.mxu0 %v275
    %303 = vmatprep.subr.mxu0 0.0
    %304 = vmatpush1.msra.mxu0 %v276
    %305 = vmatprep.subr.mxu0 0.0
    %306 = vmatpush1.msra.mxu0 %v277
    %307 = vmatprep.subr.mxu0 0.0
    %308 = vmatpush1.msra.mxu0 %v278
    %309 = vmatprep.subr.mxu0 0.0
    %310 = vmatpush1.msra.mxu0 %v279
    %311 = vmatprep.subr.mxu0 0.0
    %312 = vmatpush1.msra.mxu0 %v280
    %313 = vmatprep.subr.mxu0 0.0
    %314 = vmatpush1.msra.mxu0 %v281
    %315 = vmatprep.subr.mxu0 0.0
    %316 = vmatpush1.msra.mxu0 %v282
    %317 = vmatprep.subr.mxu0 0.0
    %318 = vmatpush1.msra.mxu0 %v283
    %319 = vmatprep.subr.mxu0 0.0
    %320 = vmatpush1.msra.mxu0 %v284
    %321 = vmatprep.subr.mxu0 0.0
    %322 = vmatpush1.msra.mxu0 %v285
    %323 = vmatprep.subr.mxu0 0.0
    %324 = vmatpush1.msra.mxu0 0.0
    %325 = vmatprep.subr.mxu0 0.0
    %326 = vmatpush1.msra.mxu0 0.0
    %327 = vmatprep.subr.mxu0 0.0
    %328 = vmatpush1.msra.mxu0 0.0
    %329 = vmatprep.subr.mxu0 0.0
    %330 = vmatpush1.msra.mxu0 0.0
    %331 = vmatprep.subr.mxu0 0.0
    %332 = vmatpush1.msra.mxu0 0.0
    %333 = vmatprep.subr.mxu0 0.0
    %334 = vmatpush1.msra.mxu0 0.0
    %335 = vmatprep.subr.mxu0 0.0
    %336 = vmatpush1.msra.mxu0 0.0
    %337 = vmatprep.subr.mxu0 0.0
    %338 = vmatpush1.msra.mxu0 0.0
    %339 = vmatprep.subr.mxu0 0.0
    %340 = vmatpush1.msra.mxu0 0.0
    %341 = vmatprep.subr.mxu0 0.0
    %342 = vmatpush1.msra.mxu0 0.0
    %343 = vmatprep.subr.mxu0 0.0
    %344 = vmatpush1.msra.mxu0 0.0
    %345 = vmatprep.subr.mxu0 0.0
    %346 = vmatpush1.msra.mxu0 0.0
    %347 = vmatprep.subr.mxu0 0.0
    %348 = vmatpush1.msra.mxu0 0.0
    %349 = vmatprep.subr.mxu0 0.0
    %350 = vmatpush1.msra.mxu0 0.0
    %351 = vmatprep.subr.mxu0 0.0
    %352 = vmatpush1.msra.mxu0 0.0
    %353 = vmatprep.subr.mxu0 0.0
    %354 = vmatpush1.msra.mxu0 0.0
    %355 = vmatprep.mubr.f32.mxu0 0.0
    %356 = vmatmul.mubr.f32.gmra.mrb[0].mxu0 %v269
    %v357 = vpop.f32.mrb[0].mxu0
    %v358 = vadd.f32 %v290, %v357
    %v359 = vpop.f32.mrb[0].mxu0
    %360 = vdwg.mxu0
    %v361 = vld [vmem:[%s4 + $0x3] sm:$0x1]
    %v362 = vld [vmem:[%s4 + $0x4] sm:$0x1]
    %v363 = vld [vmem:[%s4 + $0x5] sm:$0x1]
    %v364 = vlaneseq
    %v365 = vshrl.u32 %v364, 7
    %v366 = vsub.s32 0, %v365
    %v367 = vrot.slane %v361, %v366
    %v368 = vsub.f32 %v367, %v358
    %v369 = vmax.f32 %v368, 0.0
    %v370 = vand.u32 2147483647, %v368
    %v371 = vsub.f32 0.0, %v370
    %v372 = vmul.f32 %v371, 1.442695
    %v373 = vpow.pop %v372
    %v374 = vadd.f32 %v373, 1.0
    %v375 = vlog2.pop %v374
    %v376 = vmul.f32 %v375, 0.6931472
    %v377 = vmul.f32 -0.5, %v373
    %v378 = vadd.f32 %v377, 1.0
    %v379 = vmul.f32 %v378, %v373
    %v380 = vand.u32 2147483647, %v373
    %vm381 = vcmp.lt.f32.partialorder %v380, 0.0004427343
    %v382 = vsel %vm381, %v379, %v376
    %v383 = vadd.f32 %v369, %v382
    %v384 = vsub.f32 %v367, %v383
    %v385 = vlaneseq
    %v386 = vshrl.u32 %v385, 7
    %v387 = vsub.s32 0, %v386
    %v388 = vrot.slane %v362, %v387
    %v389 = vsub.f32 %v384, %v388
    %v390 = vmax.f32 %v389, 0.0
    %v391 = vand.u32 2147483647, %v389
    %v392 = vsub.f32 0.0, %v391
    %v393 = vmul.f32 %v392, 1.442695
    %v394 = vpow.pop %v393
    %v395 = vadd.f32 %v394, 1.0
    %v396 = vlog2.pop %v395
    %v397 = vmul.f32 %v396, 0.6931472
    %v398 = vmul.f32 -0.5, %v394
    %v399 = vadd.f32 %v398, 1.0
    %v400 = vmul.f32 %v399, %v394
    %v401 = vand.u32 2147483647, %v394
    %vm402 = vcmp.lt.f32.partialorder %v401, 0.0004427343
    %v403 = vsel %vm402, %v400, %v397
    %v404 = vadd.f32 %v390, %v403
    %v405 = vadd.f32 %v388, %v404
    %vm406 = vcmp.gt.f32.partialorder %v363, 0.5
    %v407 = vmul.f32 %v405, 1.442695
    %v408 = vpow.pop %v407
    %v409 = vsel %vm406, 1, 0
    %v410 = vlaneseq
    %v411 = vshrl.u32 %v410, 7
    %v412 = vsub.s32 0, %v411
    %v413 = vrot.slane %v409, %v412
    %vm414 = vcmp.eq.s32.totalorder %v413, 1
    %v415 = vsel %vm414, %v408, %v358
    %416 = vst [vmem:[#allocation7] sm:$0xff] %v415
    // Predicated region
    $region30: #{tpu_custom_call.1} parent=1 // pred_check
      _
    $region31: #{tpu_custom_call.1} parent=1 // pred_check_branch
      %418 = sbr.rel (0) target = $region33
    $region32: #{tpu_custom_call.1} parent=1 // pred_region
      %s420 = ssub.s32 128, 128
      %421 = vsyncadd [#allocation4], %s420
      %s423 = sshll.u32 [#allocation7], 4
      %s424 = int_to_ptr.vmem [resolvable:$true] %s423
      %426 = dma.vmem_to_hbm [thread:$0]  %s424, 128, %s5, [#allocation4]
    $region33: #{tpu_custom_call.1} parent=1 // pred_fallthru
      _
    // Predicated region
    $region34: #{tpu_custom_call.1} parent=1 // pred_check
      _
    $region35: #{tpu_custom_call.1} parent=1 // pred_check_branch
      %428 = sbr.rel (0) target = $region37
    $region36: #{tpu_custom_call.1} parent=1 // pred_region
      %429 = dma.done [#allocation4], 128
    $region37: #{tpu_custom_call.1} parent=1 // pred_fallthru
      _
    %430 = vsyncpa [#allocation3], 1
    %431 = vsyncpa [#allocation6], 1
    %432 = vsyncpa [#allocation4], 1

</llo_original>
